<compile_context>
chip_gen: v5e
topology: v5e:2x2
jax: 0.10.0
libtpu: 0.0.40
codegen_flags: <defaults>
</compile_context>

<pallas_src>
import jax
import jax.numpy as jnp
from jax.experimental import pallas as pl
from jax.experimental.pallas import tpu as pltpu


def _round_up(x: int, m: int) -> int:
    return (x + m - 1) // m * m


def perceptron_kernel(x_ref, w1_ref, b1_ref, w2_ref, o_ref):
    # Cast the streamed f32 x tile to bf16 just before the MXU (VPU work,
    # hidden under the matmul) instead of a separate XLA pad/convert pass.
    x_bf = x_ref[...].astype(jnp.bfloat16)
    # hidden = relu(x @ W1 + b1): bf16 MXU matmul with f32 accumulation,
    # bias-add + ReLU in f32 on the VPU.
    h = jnp.dot(x_bf, w1_ref[...], preferred_element_type=jnp.float32)
    h = jnp.maximum(h + b1_ref[...], 0.0)                  # (TB, H) + (1, H)
    # logits = hidden @ W2 (no bias): cast back to bf16 for the MXU.
    logits = jnp.dot(h.astype(w2_ref.dtype), w2_ref[...],
                     preferred_element_type=jnp.float32)
    # sigmoid (EUP exp + VPU) in f32; store full-extent (unpadded) lanes.
    o_ref[...] = jax.nn.sigmoid(logits).astype(o_ref.dtype)


def perceptron_forward(x, w1, b1, w2, *, tb=None):
    """x: (B, D_in), w1: (D_in, H), b1: (H,)/(1,H), w2: (H, D_out) -> (B, D_out) f32."""
    B, D_in = x.shape
    H = w1.shape[1]
    D_out = w2.shape[1]

    x = x.astype(jnp.float32)
    b1 = jnp.reshape(b1, (1, H)).astype(jnp.float32)
    # One-time wrapper cast for the *resident* weights (fetched once) — this
    # is an intentional inference-grade bf16/f32-accumulate deviation from
    # the pure-f32 PyTorch math (covered by test tolerances below).
    w1_bf = w1.astype(jnp.bfloat16)
    w2_bf = w2.astype(jnp.bfloat16)

    # --- per-generation VMEM budget ----------------------------------------
    try:
        cap = int(getattr(pltpu.get_tpu_info(), "vmem_capacity_bytes",
                          64 << 20))
    except Exception:                                     # no query available
        cap = 64 << 20
    # ~108 MiB on v5e/v6e (128 MiB), ~54 MiB on v7x (64 MiB): headroom for
    # compiler-internal scratch.
    budget = max(int(cap * 0.85), 32 << 20)

    # --- batch tile selection ----------------------------------------------
    if tb is None:
        # >= 2 tiles so the "parallel" axis shards across v7x's two
        # TensorCores; cap at 512 rows (good HBM-roofline point).
        tb = min(512, _round_up(pl.cdiv(B, 2), 8))
    tb = max(8, _round_up(tb, 8))

    weights_bytes = (D_in * H + H * D_out) * 2 + H * 4    # single-buffered

    def footprint(t):
        return (2 * t * D_in * 4          # f32 x tiles, double-buffered
                + 2 * t * D_out * 4       # f32 out tiles, double-buffered
                + weights_bytes           # resident W1/W2 (bf16) + b1 (f32)
                + t * (D_in * 2 + H * 6 + D_out * 4))   # in-kernel temporaries

    # Shrink the batch tile (instead of silently under-provisioning VMEM)
    # until the footprint fits the generation's budget.
    while tb > 8 and footprint(tb) > budget:
        tb = max(8, _round_up(tb // 2, 8))

    Bp = _round_up(B, tb)
    x_p = x if Bp == B else jnp.pad(x, ((0, Bp - B), (0, 0)))

    vmem_limit = min(max(footprint(tb) + (4 << 20), 32 << 20), budget)
    grid = (Bp // tb,)

    def run(single_buffer_weights):
        w_kw = dict(pipeline_mode=pl.Buffered(1)) if single_buffer_weights else {}
        in_specs = [
            pl.BlockSpec((tb, D_in), lambda i: (i, 0)),            # streamed x
            pl.BlockSpec((D_in, H), lambda i: (0, 0), **w_kw),     # resident W1
            pl.BlockSpec((1, H), lambda i: (0, 0), **w_kw),        # resident b1
            pl.BlockSpec((H, D_out), lambda i: (0, 0), **w_kw),    # resident W2
        ]
        return pl.pallas_call(
            perceptron_kernel,
            out_shape=jax.ShapeDtypeStruct((Bp, D_out), jnp.float32),
            grid=grid,
            in_specs=in_specs,
            out_specs=pl.BlockSpec((tb, D_out), lambda i: (i, 0)),
            compiler_params=pltpu.CompilerParams(
                dimension_semantics=("parallel",),
                vmem_limit_bytes=int(vmem_limit),
            ),
        )(x_p, w1_bf, b1, w2_bf)

    try:
        out_p = run(True)
    except Exception:
        # pl.Buffered(1) / pipeline_mode unsupported on this JAX version:
        # default double-buffered residents are still correct, just use more
        # VMEM.
        out_p = run(False)

    return out_p if Bp == B else out_p[:B]


if __name__ == "__main__":
    # Small shapes consistent with the module's two Linear layers; batch 32
    # with the auto-picked 16-row tile exercises the multi-tile (pipelined,
    # megacore-parallel) path.
    batch, input_dim, hidden_dim, output_dim = 32, 32, 32, 16

    key = jax.random.PRNGKey(0)
    kx, k1, kb1, k2 = jax.random.split(key, 4)

    # Deterministic init mimicking torch nn.Linear U(-1/sqrt(fan_in), 1/sqrt(fan_in)).
    bound1 = 1.0 / jnp.sqrt(input_dim)
    bound2 = 1.0 / jnp.sqrt(hidden_dim)
    x = jax.random.normal(kx, (batch, input_dim), dtype=jnp.float32)
    w1 = jax.random.uniform(k1, (input_dim, hidden_dim), jnp.float32,
                            -bound1, bound1)
    b1 = jax.random.uniform(kb1, (1, hidden_dim), jnp.float32, -bound1, bound1)
    w2 = jax.random.uniform(k2, (hidden_dim, output_dim), jnp.float32,
                            -bound2, bound2)

    out = perceptron_forward(x, w1, b1, w2)
    out = jax.block_until_ready(out)
    assert out.shape == (batch, output_dim)

    # Reference with matching bf16 inputs / f32 accumulation (tight tolerance).
    x_bf, w1_bf, w2_bf = (a.astype(jnp.bfloat16) for a in (x, w1, w2))
    h_ref = jnp.maximum(
        jnp.dot(x_bf, w1_bf, preferred_element_type=jnp.float32) + b1, 0.0)
    ref_bf = jax.nn.sigmoid(
        jnp.dot(h_ref.astype(jnp.bfloat16), w2_bf,
                preferred_element_type=jnp.float32))
    assert jnp.allclose(out, ref_bf, atol=2e-3, rtol=2e-3), (
        jnp.max(jnp.abs(out - ref_bf)))

    # Sanity check against the full-f32 math (looser tolerance due to bf16 cast).
    ref_f32 = jax.nn.sigmoid(jnp.maximum(x @ w1 + b1, 0.0) @ w2)
    assert jnp.allclose(out, ref_f32, atol=3e-2, rtol=3e-2), (
        jnp.max(jnp.abs(out - ref_f32)))

    print("KERNEL_OK")
</pallas_src>

<mosaic_0001>
module attributes {stable_mosaic.version = 11 : i64} {
  func.func @perceptron_kernel(%arg0: i32, %arg1: memref<16x32xf32, #tpu.memory_space<vmem>>, %arg2: memref<32x32xbf16, #tpu.memory_space<vmem>>, %arg3: memref<1x32xf32, #tpu.memory_space<vmem>>, %arg4: memref<32x16xbf16, #tpu.memory_space<vmem>>, %arg5: memref<16x16xf32, #tpu.memory_space<vmem>>) attributes {dimension_semantics = [#tpu.dimension_semantics<parallel>], iteration_bounds = array<i64: 2>, scalar_prefetch = 0 : i64, scratch_operands = 0 : i64, tpu.core_type = #tpu.core_type<tc>, window_params = [{transform_indices = @transform_0, window_bounds = array<i64: 16, 32>}, {pipeline_mode = #tpu.pipeline_mode<synchronous>, transform_indices = @transform_1, window_bounds = array<i64: 32, 32>}, {pipeline_mode = #tpu.pipeline_mode<synchronous>, transform_indices = @transform_2, window_bounds = array<i64: 1, 32>}, {pipeline_mode = #tpu.pipeline_mode<synchronous>, transform_indices = @transform_3, window_bounds = array<i64: 32, 16>}, {transform_indices = @transform_4, window_bounds = array<i64: 16, 16>}]} {
    %c0 = arith.constant 0 : index
    %c0_0 = arith.constant 0 : index
    %0 = vector.load %arg1[%c0, %c0_0] : memref<16x32xf32, #tpu.memory_space<vmem>>, vector<16x32xf32>
    %1 = arith.truncf %0 : vector<16x32xf32> to vector<16x32xbf16>
    %c0_1 = arith.constant 0 : index
    %c0_2 = arith.constant 0 : index
    %2 = vector.load %arg2[%c0_1, %c0_2] : memref<32x32xbf16, #tpu.memory_space<vmem>>, vector<32x32xbf16>
    %cst = arith.constant dense<0.000000e+00> : vector<16x32xf32>
    %3 = tpu.matmul %1, %2, %cst {dimension_numbers = #tpu.dot_dimension_numbers<[1], [0], [0], [1], [0, 0, 1, 1], [], []>} : vector<16x32xbf16>, vector<32x32xbf16>, vector<16x32xf32> -> vector<16x32xf32>
    %c0_3 = arith.constant 0 : index
    %c0_4 = arith.constant 0 : index
    %4 = vector.load %arg3[%c0_3, %c0_4] : memref<1x32xf32, #tpu.memory_space<vmem>>, vector<1x32xf32>
    %5 = vector.broadcast %4 : vector<1x32xf32> to vector<16x32xf32>
    %6 = arith.addf %3, %5 : vector<16x32xf32>
    %cst_5 = arith.constant 0.000000e+00 : f32
    %7 = vector.broadcast %cst_5 : f32 to vector<16x32xf32>
    %8 = arith.maximumf %6, %7 : vector<16x32xf32>
    %9 = arith.truncf %8 : vector<16x32xf32> to vector<16x32xbf16>
    %c0_6 = arith.constant 0 : index
    %c0_7 = arith.constant 0 : index
    %10 = vector.load %arg4[%c0_6, %c0_7] : memref<32x16xbf16, #tpu.memory_space<vmem>>, vector<32x16xbf16>
    %cst_8 = arith.constant dense<0.000000e+00> : vector<16x16xf32>
    %11 = tpu.matmul %9, %10, %cst_8 {dimension_numbers = #tpu.dot_dimension_numbers<[1], [0], [0], [1], [0, 0, 1, 1], [], []>} : vector<16x32xbf16>, vector<32x16xbf16>, vector<16x16xf32> -> vector<16x16xf32>
    %12 = arith.negf %11 : vector<16x16xf32>
    %13 = math.exp %12 : vector<16x16xf32>
    %cst_9 = arith.constant 1.000000e+00 : f32
    %14 = vector.broadcast %cst_9 : f32 to vector<16x16xf32>
    %15 = arith.addf %14, %13 : vector<16x16xf32>
    %16 = arith.divf %14, %15 : vector<16x16xf32>
    %c0_10 = arith.constant 0 : index
    %c0_11 = arith.constant 0 : index
    %17 = vector.load %arg5[%c0_10, %c0_11] : memref<16x16xf32, #tpu.memory_space<vmem>>, vector<16x16xf32>
    tpu.vector_store %arg5[%c0_10, %c0_11], %16 {strides = array<i32>} : memref<16x16xf32, #tpu.memory_space<vmem>>, vector<16x16xf32>,
    return
  }
  func.func @transform_0(%arg0: i32) -> (i32, i32) {
    %c0_i32 = arith.constant 0 : i32
    %c0_i32_0 = arith.constant 0 : i32
    return %arg0, %c0_i32 : i32, i32
  }
  func.func @transform_1(%arg0: i32) -> (i32, i32) {
    %c0_i32 = arith.constant 0 : i32
    %c0_i32_0 = arith.constant 0 : i32
    %c0_i32_1 = arith.constant 0 : i32
    return %c0_i32, %c0_i32_0 : i32, i32
  }
  func.func @transform_2(%arg0: i32) -> (i32, i32) {
    %c0_i32 = arith.constant 0 : i32
    %c0_i32_0 = arith.constant 0 : i32
    %c0_i32_1 = arith.constant 0 : i32
    return %c0_i32, %c0_i32_0 : i32, i32
  }
  func.func @transform_3(%arg0: i32) -> (i32, i32) {
    %c0_i32 = arith.constant 0 : i32
    %c0_i32_0 = arith.constant 0 : i32
    %c0_i32_1 = arith.constant 0 : i32
    return %c0_i32, %c0_i32_0 : i32, i32
  }
  func.func @transform_4(%arg0: i32) -> (i32, i32) {
    %c0_i32 = arith.constant 0 : i32
    %c0_i32_0 = arith.constant 0 : i32
    return %arg0, %c0_i32 : i32, i32
  }
}

module attributes {stable_mosaic.version = 11 : i64} {
  func.func @perceptron_kernel(%arg0: i32, %arg1: memref<16x32xf32, #tpu.memory_space<vmem>>, %arg2: memref<32x32xbf16, #tpu.memory_space<vmem>>, %arg3: memref<1x32xf32, #tpu.memory_space<vmem>>, %arg4: memref<32x16xbf16, #tpu.memory_space<vmem>>, %arg5: memref<16x16xf32, #tpu.memory_space<vmem>>) attributes {dimension_semantics = [#tpu.dimension_semantics<parallel>], iteration_bounds = array<i64: 2>, scalar_prefetch = 0 : i64, scratch_operands = 0 : i64, tpu.core_type = #tpu.core_type<tc>, window_params = [{transform_indices = @transform_0, window_bounds = array<i64: 16, 32>}, {pipeline_mode = #tpu.pipeline_mode<synchronous>, transform_indices = @transform_1, window_bounds = array<i64: 32, 32>}, {pipeline_mode = #tpu.pipeline_mode<synchronous>, transform_indices = @transform_2, window_bounds = array<i64: 1, 32>}, {pipeline_mode = #tpu.pipeline_mode<synchronous>, transform_indices = @transform_3, window_bounds = array<i64: 32, 16>}, {transform_indices = @transform_4, window_bounds = array<i64: 16, 16>}]} {
    %c0 = arith.constant 0 : index
    %c0_0 = arith.constant 0 : index
    %0 = vector.load %arg1[%c0, %c0_0] : memref<16x32xf32, #tpu.memory_space<vmem>>, vector<16x32xf32>
    %1 = arith.truncf %0 : vector<16x32xf32> to vector<16x32xbf16>
    %c0_1 = arith.constant 0 : index
    %c0_2 = arith.constant 0 : index
    %2 = vector.load %arg2[%c0_1, %c0_2] : memref<32x32xbf16, #tpu.memory_space<vmem>>, vector<32x32xbf16>
    %cst = arith.constant dense<0.000000e+00> : vector<16x32xf32>
    %3 = tpu.matmul %1, %2, %cst {dimension_numbers = #tpu.dot_dimension_numbers<[1], [0], [0], [1], [0, 0, 1, 1], [], []>} : vector<16x32xbf16>, vector<32x32xbf16>, vector<16x32xf32> -> vector<16x32xf32>
    %c0_3 = arith.constant 0 : index
    %c0_4 = arith.constant 0 : index
    %4 = vector.load %arg3[%c0_3, %c0_4] : memref<1x32xf32, #tpu.memory_space<vmem>>, vector<1x32xf32>
    %5 = vector.broadcast %4 : vector<1x32xf32> to vector<16x32xf32>
    %6 = arith.addf %3, %5 : vector<16x32xf32>
    %cst_5 = arith.constant 0.000000e+00 : f32
    %7 = vector.broadcast %cst_5 : f32 to vector<16x32xf32>
    %8 = arith.maximumf %6, %7 : vector<16x32xf32>
    %9 = arith.truncf %8 : vector<16x32xf32> to vector<16x32xbf16>
    %c0_6 = arith.constant 0 : index
    %c0_7 = arith.constant 0 : index
    %10 = vector.load %arg4[%c0_6, %c0_7] : memref<32x16xbf16, #tpu.memory_space<vmem>>, vector<32x16xbf16>
    %cst_8 = arith.constant dense<0.000000e+00> : vector<16x16xf32>
    %11 = tpu.matmul %9, %10, %cst_8 {dimension_numbers = #tpu.dot_dimension_numbers<[1], [0], [0], [1], [0, 0, 1, 1], [], []>} : vector<16x32xbf16>, vector<32x16xbf16>, vector<16x16xf32> -> vector<16x16xf32>
    %12 = arith.negf %11 : vector<16x16xf32>
    %13 = math.exp %12 : vector<16x16xf32>
    %cst_9 = arith.constant 1.000000e+00 : f32
    %14 = vector.broadcast %cst_9 : f32 to vector<16x16xf32>
    %15 = arith.addf %14, %13 : vector<16x16xf32>
    %16 = arith.divf %14, %15 : vector<16x16xf32>
    %c0_10 = arith.constant 0 : index
    %c0_11 = arith.constant 0 : index
    %17 = vector.load %arg5[%c0_10, %c0_11] : memref<16x16xf32, #tpu.memory_space<vmem>>, vector<16x16xf32>
    tpu.vector_store %arg5[%c0_10, %c0_11], %16 {strides = array<i32>} : memref<16x16xf32, #tpu.memory_space<vmem>>, vector<16x16xf32>,
    return
  }
  func.func @transform_0(%arg0: i32) -> (i32, i32) {
    %c0_i32 = arith.constant 0 : i32
    %c0_i32_0 = arith.constant 0 : i32
    return %arg0, %c0_i32 : i32, i32
  }
  func.func @transform_1(%arg0: i32) -> (i32, i32) {
    %c0_i32 = arith.constant 0 : i32
    %c0_i32_0 = arith.constant 0 : i32
    %c0_i32_1 = arith.constant 0 : i32
    return %c0_i32, %c0_i32_0 : i32, i32
  }
  func.func @transform_2(%arg0: i32) -> (i32, i32) {
    %c0_i32 = arith.constant 0 : i32
    %c0_i32_0 = arith.constant 0 : i32
    %c0_i32_1 = arith.constant 0 : i32
    return %c0_i32, %c0_i32_0 : i32, i32
  }
  func.func @transform_3(%arg0: i32) -> (i32, i32) {
    %c0_i32 = arith.constant 0 : i32
    %c0_i32_0 = arith.constant 0 : i32
    %c0_i32_1 = arith.constant 0 : i32
    return %c0_i32, %c0_i32_0 : i32, i32
  }
  func.func @transform_4(%arg0: i32) -> (i32, i32) {
    %c0_i32 = arith.constant 0 : i32
    %c0_i32_0 = arith.constant 0 : i32
    return %arg0, %c0_i32 : i32, i32
  }
}

</mosaic_0001>

<llo_original>
// kernel: tpu_custom_call.1
$region0: #{tpu_custom_call.1}
  #allocation0 [shape = 'u32[]', space=smem, size = 0x4, offset = 0x4, fixed_abs, tag = 'smem constant byte address 0x4 - core index']
  #allocation1 [shape = 'u32[72,128]{1,0:T(1,128)}', space=vmem, size = 0x9000, scoped, tag = 'internal scratch']
  %s0 = inlined_call_operand.hbm [shape: f32[32,32], index: 0, kind: input, shape index: {}]
  %s1 = inlined_call_operand.vmem [shape: bf16[32,32], index: 1, kind: input, shape index: {}]
  %s2 = inlined_call_operand.vmem [shape: f32[1,32], index: 2, kind: input, shape index: {}]
  %s3 = inlined_call_operand.vmem [shape: bf16[32,16], index: 3, kind: input, shape index: {}]
  %s4 = inlined_call_operand.vmem [shape: f32[32,16], index: 4, kind: output, shape index: {}]
  %s5 = sld [smem:[#allocation0]]
  $region53: #{tpu_custom_call.1} parent=0
    _
  %s7 = ssub.s32 1, %s5
  %s8 = scalar_select 0, %s7, %s5
  $region1: #{tpu_custom_call.1} parent=0
    #allocation2 [shape = 'u8[16384]{0}', space=vmem, size = 0x4000, scoped, tag = 'input window, operand 0']
    #allocation3 [shape = 's32[2]{0}', space=sflag, size = 0x8, scoped, tag = 'scoped memory for tpu_custom_call.1']
    %9 = vsyncpa [#allocation3], 0
    %s10 = scalar_lea.sflag [#allocation3], 1
    %11 = vsyncpa %s10, 0
    loop: start=0, step=1, limit=4
    $region2: #{tpu_custom_call.1} parent=1 // loop_pre_header
      _
    $region3: #{tpu_custom_call.1} parent=1 // loop_header
      %s13 = sphi 0, %s17
      %p14 = scmp.ge.s32.totalorder %s13, 4
      %s23 = sphi 0, %s25
      %s26 = sphi 0, %s23
      %s27 = sphi 0, %s26
      %s43 = sphi 0, %s27
      %s47 = sphi 0, %s47
      %s49 = sphi 0, %s47
      %s50 = sphi 0, %s49
      %s64 = sphi 0, %s50
      %s68 = sphi 0, %s68
      %s70 = sphi 0, %s68
      %s71 = sphi 0, %s70
      %s85 = sphi 0, %s71
      %s89 = sphi 0, %s89
      %s91 = sphi 0, %s89
      %s92 = sphi 0, %s91
      %s106 = sphi 0, %s92
      %s112 = sphi 0, %s114
      %s115 = sphi 0, %s112
      %s116 = sphi 0, %s115
      %s132 = sphi 0, %s116
    $region4: #{tpu_custom_call.1} parent=1 // loop_header_branch
      %16 = sbr.rel (%p14) target = $region8
    $region5: #{tpu_custom_call.1} parent=1 // loop_body
      %s18 = ssub.s32 %s13, 1
      %s19 = ssub.s32 %s13, 2
      %s20 = sadd.s32 %s13, 1
      %s21 = ssub.s32 %s13, %s20
      %p22 = scmp.eq.s32.totalorder %s21, 0
      %s24 = sadd.s32 %s23, 1
      %s25 = scalar_select %p22, %s23, %s24
      %p28 = pneg %p22
      %p29 = scmp.eq.s32.totalorder %s13, 1
      %p30 = por %p28, %p29
      %p31 = scmp.ne.s32.totalorder %s23, %s26
      %p32 = scmp.eq.s32.totalorder %s13, 0
      %p33 = por %p31, %p32
      %p34 = scmp.ne.s32.totalorder %s23, %s26
      %p35 = scmp.eq.s32.totalorder %s18, 1
      %p36 = por %p34, %p35
      %p37 = scmp.ne.s32.totalorder %s26, %s27
      %p38 = scmp.eq.s32.totalorder %s18, 0
      %p39 = por %p37, %p38
      %p40 = scmp.ne.s32.totalorder %s26, %s27
      %p41 = scmp.eq.s32.totalorder %s19, 1
      %p42 = por %p40, %p41
      %p44 = scmp.ne.s32.totalorder %s27, %s43
      %p45 = scmp.eq.s32.totalorder %s19, 0
      %p46 = por %p44, %p45
      %s48 = sadd.s32 %s47, 1
      %p51 = scmp.eq.s32.totalorder %s13, 1
      %p52 = scmp.ne.s32.totalorder %s47, %s49
      %p53 = scmp.eq.s32.totalorder %s13, 0
      %p54 = por %p52, %p53
      %p55 = scmp.ne.s32.totalorder %s47, %s49
      %p56 = scmp.eq.s32.totalorder %s18, 1
      %p57 = por %p55, %p56
      %p58 = scmp.ne.s32.totalorder %s49, %s50
      %p59 = scmp.eq.s32.totalorder %s18, 0
      %p60 = por %p58, %p59
      %p61 = scmp.ne.s32.totalorder %s49, %s50
      %p62 = scmp.eq.s32.totalorder %s19, 1
      %p63 = por %p61, %p62
      %p65 = scmp.ne.s32.totalorder %s50, %s64
      %p66 = scmp.eq.s32.totalorder %s19, 0
      %p67 = por %p65, %p66
      %s69 = sadd.s32 %s68, 1
      %p72 = scmp.eq.s32.totalorder %s13, 1
      %p73 = scmp.ne.s32.totalorder %s68, %s70
      %p74 = scmp.eq.s32.totalorder %s13, 0
      %p75 = por %p73, %p74
      %p76 = scmp.ne.s32.totalorder %s68, %s70
      %p77 = scmp.eq.s32.totalorder %s18, 1
      %p78 = por %p76, %p77
      %p79 = scmp.ne.s32.totalorder %s70, %s71
      %p80 = scmp.eq.s32.totalorder %s18, 0
      %p81 = por %p79, %p80
      %p82 = scmp.ne.s32.totalorder %s70, %s71
      %p83 = scmp.eq.s32.totalorder %s19, 1
      %p84 = por %p82, %p83
      %p86 = scmp.ne.s32.totalorder %s71, %s85
      %p87 = scmp.eq.s32.totalorder %s19, 0
      %p88 = por %p86, %p87
      %s90 = sadd.s32 %s89, 1
      %p93 = scmp.eq.s32.totalorder %s13, 1
      %p94 = scmp.ne.s32.totalorder %s89, %s91
      %p95 = scmp.eq.s32.totalorder %s13, 0
      %p96 = por %p94, %p95
      %p97 = scmp.ne.s32.totalorder %s89, %s91
      %p98 = scmp.eq.s32.totalorder %s18, 1
      %p99 = por %p97, %p98
      %p100 = scmp.ne.s32.totalorder %s91, %s92
      %p101 = scmp.eq.s32.totalorder %s18, 0
      %p102 = por %p100, %p101
      %p103 = scmp.ne.s32.totalorder %s91, %s92
      %p104 = scmp.eq.s32.totalorder %s19, 1
      %p105 = por %p103, %p104
      %p107 = scmp.ne.s32.totalorder %s92, %s106
      %p108 = scmp.eq.s32.totalorder %s19, 0
      %p109 = por %p107, %p108
      %s110 = ssub.s32 %s13, %s20
      %p111 = scmp.eq.s32.totalorder %s110, 0
      %s113 = sadd.s32 %s112, 1
      %s114 = scalar_select %p111, %s112, %s113
      %p117 = pneg %p111
      %p118 = scmp.eq.s32.totalorder %s13, 1
      %p119 = por %p117, %p118
      %p120 = scmp.ne.s32.totalorder %s112, %s115
      %p121 = scmp.eq.s32.totalorder %s13, 0
      %p122 = por %p120, %p121
      %p123 = scmp.ne.s32.totalorder %s112, %s115
      %p124 = scmp.eq.s32.totalorder %s18, 1
      %p125 = por %p123, %p124
      %p126 = scmp.ne.s32.totalorder %s115, %s116
      %p127 = scmp.eq.s32.totalorder %s18, 0
      %p128 = por %p126, %p127
      %p129 = scmp.ne.s32.totalorder %s115, %s116
      %p130 = scmp.eq.s32.totalorder %s19, 1
      %p131 = por %p129, %p130
      %p133 = scmp.ne.s32.totalorder %s116, %s132
      %p134 = scmp.eq.s32.totalorder %s19, 0
      %p135 = por %p133, %p134
      %p136 = scmp.le.s32.totalorder 1, %s13
      %p137 = scmp.lt.s32.totalorder %s13, 3
      %p138 = pnand %p136, %p137
      %p139 = pneg %p138
      // Predicated region
      $region9: #{tpu_custom_call.1} parent=5 // pred_check
        _
      $region10: #{tpu_custom_call.1} parent=5 // pred_check_branch
        %141 = sbr.rel (%p138) target = $region12
      $region11: #{tpu_custom_call.1} parent=5 // pred_region
        %s142 = ssub.s32 %s13, 1
        // Predicated region
        $region13: #{tpu_custom_call.1} parent=11 // pred_check
          %p143 = pneg %p60
        $region14: #{tpu_custom_call.1} parent=11 // pred_check_branch
          %145 = sbr.rel (%p143) target = $region16
        $region15: #{tpu_custom_call.1} parent=11 // pred_region
          _
        $region16: #{tpu_custom_call.1} parent=11 // pred_fallthru
          _
        // Predicated region
        $region17: #{tpu_custom_call.1} parent=11 // pred_check
          %p146 = pneg %p81
        $region18: #{tpu_custom_call.1} parent=11 // pred_check_branch
          %148 = sbr.rel (%p146) target = $region20
        $region19: #{tpu_custom_call.1} parent=11 // pred_region
          _
        $region20: #{tpu_custom_call.1} parent=11 // pred_fallthru
          _
        // Predicated region
        $region21: #{tpu_custom_call.1} parent=11 // pred_check
          %p149 = pneg %p102
        $region22: #{tpu_custom_call.1} parent=11 // pred_check_branch
          %151 = sbr.rel (%p149) target = $region24
        $region23: #{tpu_custom_call.1} parent=11 // pred_region
          _
        $region24: #{tpu_custom_call.1} parent=11 // pred_fallthru
          _
      $region12: #{tpu_custom_call.1} parent=5 // pred_fallthru
        _
      %p152 = scmp.lt.s32.totalorder %s13, 2
      // Predicated region
      $region25: #{tpu_custom_call.1} parent=5 // pred_check
        %p153 = pneg %p152
      $region26: #{tpu_custom_call.1} parent=5 // pred_check_branch
        %155 = sbr.rel (%p153) target = $region28
      $region27: #{tpu_custom_call.1} parent=5 // pred_region
        // Predicated region
        $region29: #{tpu_custom_call.1} parent=27 // pred_check
          %p156 = pneg %p33
        $region30: #{tpu_custom_call.1} parent=27 // pred_check_branch
          %158 = sbr.rel (%p156) target = $region32
        $region31: #{tpu_custom_call.1} parent=27 // pred_region
          %s159 = sand.u32 %s23, 1
          %s160 = scalar_lea.sflag [#allocation3], %s159
          %s161 = sand.u32 %s23, 1
          %s162 = smul.addr %s161, 16
          %s163 = scalar_lea.vmem [#allocation2], %s162
          %s164 = smul.u32 2, %s13
          %166 = vsyncadd %s160, 0
          %s167 = smul.addr %s164, 8
          %s168 = scalar_lea.hbm %s0, %s167
          %s169 = sshll.u32 %s168, 4
          %s170 = int_to_ptr.hbm [resolvable:$true] %s169
          %s171 = sshll.u32 %s163, 4
          %s172 = int_to_ptr.vmem [resolvable:$true] %s171
          %177 = dma.hbm_to_vmem [thread:$0]  %s170, 256, %s172, %s160, 128, 128, 8
        $region32: #{tpu_custom_call.1} parent=27 // pred_fallthru
          _
      $region28: #{tpu_custom_call.1} parent=5 // pred_fallthru
        _
      %p178 = scmp.le.s32.totalorder 1, %s13
      %p179 = scmp.lt.s32.totalorder %s13, 3
      %p180 = pnand %p178, %p179
      %p181 = pneg %p180
      // Predicated region
      $region33: #{tpu_custom_call.1} parent=5 // pred_check
        _
      $region34: #{tpu_custom_call.1} parent=5 // pred_check_branch
        %183 = sbr.rel (%p180) target = $region36
      $region35: #{tpu_custom_call.1} parent=5 // pred_region
        %s184 = ssub.s32 %s13, 1
        %s185 = sand.u32 %s26, 1
        %s186 = scalar_lea.sflag [#allocation3], %s185
        %s187 = sand.u32 %s26, 1
        %s188 = smul.addr %s187, 16
        %s189 = scalar_lea.vmem [#allocation2], %s188
        // Predicated region
        $region37: #{tpu_custom_call.1} parent=35 // pred_check
          %p190 = pneg %p39
        $region38: #{tpu_custom_call.1} parent=35 // pred_check_branch
          %192 = sbr.rel (%p190) target = $region40
        $region39: #{tpu_custom_call.1} parent=35 // pred_region
          %194 = dma.done %s186, 256
        $region40: #{tpu_custom_call.1} parent=35 // pred_fallthru
          _
        %s195 = sand.u32 %s26, 1
        %s196 = scalar_lea.sflag [#allocation3], %s195
        %s197 = sand.u32 %s26, 1
        %s198 = smul.addr %s197, 16
        %s199 = scalar_lea.vmem [#allocation2], %s198
        %p200 = pneg %p39
        %p201 = pneg %p36
        %p202 = pneg %p60
        %p203 = pneg %p57
        %p204 = pneg %p81
        %p205 = pneg %p78
        %p206 = pneg %p102
        %p207 = pneg %p99
        %p208 = pneg %p128
        %p209 = pneg %p125
        %s210 = smul.u32 2, %s18
        %p211 = scmp.lt.s32.totalorder %s210, 3
        %s212 = scalar_select %p211, %s210, 3
        %s213 = smul.addr %s212, 8
        %s214 = scalar_lea.vmem %s4, %s213
        %s215 = smul.u32 2, %s18
        %s216 = smul.u32 2, %s18
        %p217 = scmp.lt.s32.totalorder %s216, 3
        %s218 = scalar_select %p217, %s216, 3
        %s219 = smul.addr %s218, 8
        %s220 = scalar_lea.vmem %s4, %s219
        %s221 = smul.u32 2, %s18
        %v223 = vld [vmem:[%s189] sm:$0xff]
        %v224 = vld [vmem:[%s189 + $0x8] sm:$0xff]
        %v225 = vpack.c.bf16 %v224, %v223
        %v226 = vld [vmem:[%s1] sm:$0xf]
        %v227 = vld [vmem:[%s1 + $0x4] sm:$0xf]
        %v228 = vld [vmem:[%s1 + $0x8] sm:$0xf]
        %v229 = vld [vmem:[%s1 + $0xc] sm:$0xf]
        %v230 = vld [vmem:[%s2] sm:$0x1]
        %v232 = vperm.slane %v230, 0
        %v238 = vunpack.c.l.b16 %v226
        %v239 = vunpack.c.l.b16 %v227
        %v240 = vunpack.c.l.b16 %v228
        %v241 = vunpack.c.l.b16 %v229
        %v242 = vpack.c.b16 %v239, %v238
        %v243 = vpack.c.b16 %v241, %v240
        %vm246 = vcmask 261120
        %v248 = vsel %vm246, %v225, 0
        %250 = vmatpush.bf16.msra.mxu0 0
        %251 = vmatpush.bf16.msra.mxu0 0
        %252 = vmatpush.bf16.msra.mxu0 0
        %253 = vmatpush.bf16.msra.mxu0 0
        %254 = vmatpush.bf16.msra.mxu0 0
        %255 = vmatpush.bf16.msra.mxu0 0
        %256 = vmatpush.bf16.msra.mxu0 %v243
        %257 = vmatpush.bf16.msra.mxu0 %v242
        %258 = vmatmul.bf16.gmra.mxu0 %v248
        %v259 = vpop.f32.mrf.mxu0
        %v260 = vadd.f32 %v232, %v259
        %v261 = vpop.f32.mrf.mxu0
        %v262 = vadd.f32 %v232, %v261
        %263 = vdwg.mxu0
        %v264 = vmax.f32 %v260, 0.0
        %v265 = vmax.f32 %v262, 0.0
        %v266 = vpack.c.bf16 %v265, %v264
        %v267 = vld [vmem:[%s3] sm:$0xf]
        %v268 = vld [vmem:[%s3 + $0x4] sm:$0xf]
        %v269 = vld [vmem:[%s3 + $0x8] sm:$0xf]
        %v270 = vld [vmem:[%s3 + $0xc] sm:$0xf]
        %v275 = vunpack.c.l.b16 %v267
        %v276 = vunpack.c.l.b16 %v268
        %v277 = vunpack.c.l.b16 %v269
        %v278 = vunpack.c.l.b16 %v270
        %v279 = vpack.c.b16 %v276, %v275
        %v280 = vpack.c.b16 %v278, %v277
        %v284 = vsel %vm246, %v266, 0
        %286 = vmatpush.bf16.msra.mxu0 0
        %287 = vmatpush.bf16.msra.mxu0 0
        %288 = vmatpush.bf16.msra.mxu0 0
        %289 = vmatpush.bf16.msra.mxu0 0
        %290 = vmatpush.bf16.msra.mxu0 0
        %291 = vmatpush.bf16.msra.mxu0 0
        %292 = vmatpush.bf16.msra.mxu0 %v280
        %293 = vmatpush.bf16.msra.mxu0 %v279
        %294 = vmatmul.bf16.gmra.mxu0 %v284
        %v295 = vpop.f32.mrf.mxu0
        %v296 = vadd.f32 0.0, %v295
        %v297 = vpop.f32.mrf.mxu0
        %v298 = vadd.f32 0.0, %v297
        %299 = vdwg.mxu0
        %v300 = vxor.u32 %v296, 2147483648
        %v301 = vxor.u32 %v298, 2147483648
        %v302 = vmul.f32 %v300, 1.442695
        %v303 = vpow.pop %v302
        %v304 = vmul.f32 %v301, 1.442695
        %v305 = vpow.pop %v304
        %v306 = vadd.f32 %v303, 1.0
        %v307 = vadd.f32 %v305, 1.0
        %v308 = vrcp.pop %v306
        %v309 = vmul.f32 %v306, %v308
        %v310 = vsub.f32 1.0, %v309
        %v311 = vmul.f32 %v308, %v310
        %v312 = vadd.f32 %v308, %v311
        %vm313 = vweird.f32 %v306
        %vm314 = vweird.f32 %v308
        %vm315 = vmor %vm313, %vm314
        %v316 = vsel %vm315, %v308, %v312
        %v317 = vand.u32 2147483647, %v306
        %vm318 = vcmp.eq.f32.partialorder %v317, 8.507059e+37
        %v319 = vand.u32 %v306, 2147483648
        %v320 = vor.u32 1.1754944e-38, %v319
        %v321 = vsel %vm318, %v320, %v316
        %v322 = vmul.f32 1.0, %v321
        %v323 = vrcp.pop %v307
        %v324 = vmul.f32 %v307, %v323
        %v325 = vsub.f32 1.0, %v324
        %v326 = vmul.f32 %v323, %v325
        %v327 = vadd.f32 %v323, %v326
        %vm328 = vweird.f32 %v307
        %vm329 = vweird.f32 %v323
        %vm330 = vmor %vm328, %vm329
        %v331 = vsel %vm330, %v323, %v327
        %v332 = vand.u32 2147483647, %v307
        %vm333 = vcmp.eq.f32.partialorder %v332, 8.507059e+37
        %v334 = vand.u32 %v307, 2147483648
        %v335 = vor.u32 1.1754944e-38, %v334
        %v336 = vsel %vm333, %v335, %v331
        %v337 = vmul.f32 1.0, %v336
        %vm338 = vcmask 130048
        %339 = vst.msk [vmem:[%s220] sm:$0xff] %vm338, %v322
        %340 = vst.msk [vmem:[%s220 + $0x8] sm:$0xff] %vm338, %v337
        %s341 = smul.u32 2, %s18
        %p342 = scmp.lt.s32.totalorder %s341, 3
        %s343 = scalar_select %p342, %s341, 3
        %s344 = smul.addr %s343, 8
        %s345 = scalar_lea.vmem %s4, %s344
        // Predicated region
        $region41: #{tpu_custom_call.1} parent=35 // pred_check
          %p346 = pneg %p125
        $region42: #{tpu_custom_call.1} parent=35 // pred_check_branch
          %348 = sbr.rel (%p346) target = $region44
        $region43: #{tpu_custom_call.1} parent=35 // pred_region
          %s349 = smul.u32 2, %s18
        $region44: #{tpu_custom_call.1} parent=35 // pred_fallthru
          _
      $region36: #{tpu_custom_call.1} parent=5 // pred_fallthru
        _
      %p350 = scmp.le.s32.totalorder 2, %s13
      // Predicated region
      $region45: #{tpu_custom_call.1} parent=5 // pred_check
        %p351 = pneg %p350
      $region46: #{tpu_custom_call.1} parent=5 // pred_check_branch
        %353 = sbr.rel (%p351) target = $region48
      $region47: #{tpu_custom_call.1} parent=5 // pred_region
        %s354 = ssub.s32 %s13, 2
        // Predicated region
        $region49: #{tpu_custom_call.1} parent=47 // pred_check
          %p355 = pneg %p131
        $region50: #{tpu_custom_call.1} parent=47 // pred_check_branch
          %357 = sbr.rel (%p355) target = $region52
        $region51: #{tpu_custom_call.1} parent=47 // pred_region
          %s358 = smul.u32 2, %s19
          %p359 = scmp.lt.s32.totalorder %s358, 3
          %s360 = scalar_select %p359, %s358, 3
          %s361 = smul.addr %s360, 8
          %s362 = scalar_lea.vmem %s4, %s361
        $region52: #{tpu_custom_call.1} parent=47 // pred_fallthru
          _
      $region48: #{tpu_custom_call.1} parent=5 // pred_fallthru
        _
    $region6: #{tpu_custom_call.1} parent=1 // loop_footer
      %s17 = sadd.s32 1, %s13
    $region7: #{tpu_custom_call.1} parent=1 // loop_footer_branch
      %12 = sbr.rel target = $region3
    $region8: #{tpu_custom_call.1} parent=1 // loop_exit
      _
    %363 = vsyncpa [#allocation3], 1
    %s364 = scalar_lea.sflag [#allocation3], 1
    %365 = vsyncpa %s364, 1

// kernel: tpu_custom_call.1
$region0: #{tpu_custom_call.1}
  #allocation0 [shape = 'u32[]', space=smem, size = 0x4, offset = 0x4, fixed_abs, tag = 'smem constant byte address 0x4 - core index']
  #allocation1 [shape = 'u32[72,128]{1,0:T(1,128)}', space=vmem, size = 0x9000, scoped, tag = 'internal scratch']
  %s0 = inlined_call_operand.hbm [shape: f32[32,32], index: 0, kind: input, shape index: {}]
  %s1 = inlined_call_operand.vmem [shape: bf16[32,32], index: 1, kind: input, shape index: {}]
  %s2 = inlined_call_operand.vmem [shape: f32[1,32], index: 2, kind: input, shape index: {}]
  %s3 = inlined_call_operand.vmem [shape: bf16[32,16], index: 3, kind: input, shape index: {}]
  %s4 = inlined_call_operand.vmem [shape: f32[32,16], index: 4, kind: output, shape index: {}]
  %s5 = sld [smem:[#allocation0]]
  $region53: #{tpu_custom_call.1} parent=0
    _
  %s7 = ssub.s32 1, %s5
  %s8 = scalar_select 0, %s7, %s5
  $region1: #{tpu_custom_call.1} parent=0
    #allocation2 [shape = 'u8[16384]{0}', space=vmem, size = 0x4000, scoped, tag = 'input window, operand 0']
    #allocation3 [shape = 's32[2]{0}', space=sflag, size = 0x8, scoped, tag = 'scoped memory for tpu_custom_call.1']
    %9 = vsyncpa [#allocation3], 0
    %s10 = scalar_lea.sflag [#allocation3], 1
    %11 = vsyncpa %s10, 0
    loop: start=0, step=1, limit=4
    $region2: #{tpu_custom_call.1} parent=1 // loop_pre_header
      _
    $region3: #{tpu_custom_call.1} parent=1 // loop_header
      %s13 = sphi 0, %s17
      %p14 = scmp.ge.s32.totalorder %s13, 4
      %s23 = sphi 0, %s25
      %s26 = sphi 0, %s23
      %s27 = sphi 0, %s26
      %s43 = sphi 0, %s27
      %s47 = sphi 0, %s47
      %s49 = sphi 0, %s47
      %s50 = sphi 0, %s49
      %s64 = sphi 0, %s50
      %s68 = sphi 0, %s68
      %s70 = sphi 0, %s68
      %s71 = sphi 0, %s70
      %s85 = sphi 0, %s71
      %s89 = sphi 0, %s89
      %s91 = sphi 0, %s89
      %s92 = sphi 0, %s91
      %s106 = sphi 0, %s92
      %s112 = sphi 0, %s114
      %s115 = sphi 0, %s112
      %s116 = sphi 0, %s115
      %s132 = sphi 0, %s116
    $region4: #{tpu_custom_call.1} parent=1 // loop_header_branch
      %16 = sbr.rel (%p14) target = $region8
    $region5: #{tpu_custom_call.1} parent=1 // loop_body
      %s18 = ssub.s32 %s13, 1
      %s19 = ssub.s32 %s13, 2
      %s20 = sadd.s32 %s13, 1
      %s21 = ssub.s32 %s13, %s20
      %p22 = scmp.eq.s32.totalorder %s21, 0
      %s24 = sadd.s32 %s23, 1
      %s25 = scalar_select %p22, %s23, %s24
      %p28 = pneg %p22
      %p29 = scmp.eq.s32.totalorder %s13, 1
      %p30 = por %p28, %p29
      %p31 = scmp.ne.s32.totalorder %s23, %s26
      %p32 = scmp.eq.s32.totalorder %s13, 0
      %p33 = por %p31, %p32
      %p34 = scmp.ne.s32.totalorder %s23, %s26
      %p35 = scmp.eq.s32.totalorder %s18, 1
      %p36 = por %p34, %p35
      %p37 = scmp.ne.s32.totalorder %s26, %s27
      %p38 = scmp.eq.s32.totalorder %s18, 0
      %p39 = por %p37, %p38
      %p40 = scmp.ne.s32.totalorder %s26, %s27
      %p41 = scmp.eq.s32.totalorder %s19, 1
      %p42 = por %p40, %p41
      %p44 = scmp.ne.s32.totalorder %s27, %s43
      %p45 = scmp.eq.s32.totalorder %s19, 0
      %p46 = por %p44, %p45
      %s48 = sadd.s32 %s47, 1
      %p51 = scmp.eq.s32.totalorder %s13, 1
      %p52 = scmp.ne.s32.totalorder %s47, %s49
      %p53 = scmp.eq.s32.totalorder %s13, 0
      %p54 = por %p52, %p53
      %p55 = scmp.ne.s32.totalorder %s47, %s49
      %p56 = scmp.eq.s32.totalorder %s18, 1
      %p57 = por %p55, %p56
      %p58 = scmp.ne.s32.totalorder %s49, %s50
      %p59 = scmp.eq.s32.totalorder %s18, 0
      %p60 = por %p58, %p59
      %p61 = scmp.ne.s32.totalorder %s49, %s50
      %p62 = scmp.eq.s32.totalorder %s19, 1
      %p63 = por %p61, %p62
      %p65 = scmp.ne.s32.totalorder %s50, %s64
      %p66 = scmp.eq.s32.totalorder %s19, 0
      %p67 = por %p65, %p66
      %s69 = sadd.s32 %s68, 1
      %p72 = scmp.eq.s32.totalorder %s13, 1
      %p73 = scmp.ne.s32.totalorder %s68, %s70
      %p74 = scmp.eq.s32.totalorder %s13, 0
      %p75 = por %p73, %p74
      %p76 = scmp.ne.s32.totalorder %s68, %s70
      %p77 = scmp.eq.s32.totalorder %s18, 1
      %p78 = por %p76, %p77
      %p79 = scmp.ne.s32.totalorder %s70, %s71
      %p80 = scmp.eq.s32.totalorder %s18, 0
      %p81 = por %p79, %p80
      %p82 = scmp.ne.s32.totalorder %s70, %s71
      %p83 = scmp.eq.s32.totalorder %s19, 1
      %p84 = por %p82, %p83
      %p86 = scmp.ne.s32.totalorder %s71, %s85
      %p87 = scmp.eq.s32.totalorder %s19, 0
      %p88 = por %p86, %p87
      %s90 = sadd.s32 %s89, 1
      %p93 = scmp.eq.s32.totalorder %s13, 1
      %p94 = scmp.ne.s32.totalorder %s89, %s91
      %p95 = scmp.eq.s32.totalorder %s13, 0
      %p96 = por %p94, %p95
      %p97 = scmp.ne.s32.totalorder %s89, %s91
      %p98 = scmp.eq.s32.totalorder %s18, 1
      %p99 = por %p97, %p98
      %p100 = scmp.ne.s32.totalorder %s91, %s92
      %p101 = scmp.eq.s32.totalorder %s18, 0
      %p102 = por %p100, %p101
      %p103 = scmp.ne.s32.totalorder %s91, %s92
      %p104 = scmp.eq.s32.totalorder %s19, 1
      %p105 = por %p103, %p104
      %p107 = scmp.ne.s32.totalorder %s92, %s106
      %p108 = scmp.eq.s32.totalorder %s19, 0
      %p109 = por %p107, %p108
      %s110 = ssub.s32 %s13, %s20
      %p111 = scmp.eq.s32.totalorder %s110, 0
      %s113 = sadd.s32 %s112, 1
      %s114 = scalar_select %p111, %s112, %s113
      %p117 = pneg %p111
      %p118 = scmp.eq.s32.totalorder %s13, 1
      %p119 = por %p117, %p118
      %p120 = scmp.ne.s32.totalorder %s112, %s115
      %p121 = scmp.eq.s32.totalorder %s13, 0
      %p122 = por %p120, %p121
      %p123 = scmp.ne.s32.totalorder %s112, %s115
      %p124 = scmp.eq.s32.totalorder %s18, 1
      %p125 = por %p123, %p124
      %p126 = scmp.ne.s32.totalorder %s115, %s116
      %p127 = scmp.eq.s32.totalorder %s18, 0
      %p128 = por %p126, %p127
      %p129 = scmp.ne.s32.totalorder %s115, %s116
      %p130 = scmp.eq.s32.totalorder %s19, 1
      %p131 = por %p129, %p130
      %p133 = scmp.ne.s32.totalorder %s116, %s132
      %p134 = scmp.eq.s32.totalorder %s19, 0
      %p135 = por %p133, %p134
      %p136 = scmp.le.s32.totalorder 1, %s13
      %p137 = scmp.lt.s32.totalorder %s13, 3
      %p138 = pnand %p136, %p137
      %p139 = pneg %p138
      // Predicated region
      $region9: #{tpu_custom_call.1} parent=5 // pred_check
        _
      $region10: #{tpu_custom_call.1} parent=5 // pred_check_branch
        %141 = sbr.rel (%p138) target = $region12
      $region11: #{tpu_custom_call.1} parent=5 // pred_region
        %s142 = ssub.s32 %s13, 1
        // Predicated region
        $region13: #{tpu_custom_call.1} parent=11 // pred_check
          %p143 = pneg %p60
        $region14: #{tpu_custom_call.1} parent=11 // pred_check_branch
          %145 = sbr.rel (%p143) target = $region16
        $region15: #{tpu_custom_call.1} parent=11 // pred_region
          _
        $region16: #{tpu_custom_call.1} parent=11 // pred_fallthru
          _
        // Predicated region
        $region17: #{tpu_custom_call.1} parent=11 // pred_check
          %p146 = pneg %p81
        $region18: #{tpu_custom_call.1} parent=11 // pred_check_branch
          %148 = sbr.rel (%p146) target = $region20
        $region19: #{tpu_custom_call.1} parent=11 // pred_region
          _
        $region20: #{tpu_custom_call.1} parent=11 // pred_fallthru
          _
        // Predicated region
        $region21: #{tpu_custom_call.1} parent=11 // pred_check
          %p149 = pneg %p102
        $region22: #{tpu_custom_call.1} parent=11 // pred_check_branch
          %151 = sbr.rel (%p149) target = $region24
        $region23: #{tpu_custom_call.1} parent=11 // pred_region
          _
        $region24: #{tpu_custom_call.1} parent=11 // pred_fallthru
          _
      $region12: #{tpu_custom_call.1} parent=5 // pred_fallthru
        _
      %p152 = scmp.lt.s32.totalorder %s13, 2
      // Predicated region
      $region25: #{tpu_custom_call.1} parent=5 // pred_check
        %p153 = pneg %p152
      $region26: #{tpu_custom_call.1} parent=5 // pred_check_branch
        %155 = sbr.rel (%p153) target = $region28
      $region27: #{tpu_custom_call.1} parent=5 // pred_region
        // Predicated region
        $region29: #{tpu_custom_call.1} parent=27 // pred_check
          %p156 = pneg %p33
        $region30: #{tpu_custom_call.1} parent=27 // pred_check_branch
          %158 = sbr.rel (%p156) target = $region32
        $region31: #{tpu_custom_call.1} parent=27 // pred_region
          %s159 = sand.u32 %s23, 1
          %s160 = scalar_lea.sflag [#allocation3], %s159
          %s161 = sand.u32 %s23, 1
          %s162 = smul.addr %s161, 16
          %s163 = scalar_lea.vmem [#allocation2], %s162
          %s164 = smul.u32 2, %s13
          %166 = vsyncadd %s160, 0
          %s167 = smul.addr %s164, 8
          %s168 = scalar_lea.hbm %s0, %s167
          %s169 = sshll.u32 %s168, 4
          %s170 = int_to_ptr.hbm [resolvable:$true] %s169
          %s171 = sshll.u32 %s163, 4
          %s172 = int_to_ptr.vmem [resolvable:$true] %s171
          %177 = dma.hbm_to_vmem [thread:$0]  %s170, 256, %s172, %s160, 128, 128, 8
        $region32: #{tpu_custom_call.1} parent=27 // pred_fallthru
          _
      $region28: #{tpu_custom_call.1} parent=5 // pred_fallthru
        _
      %p178 = scmp.le.s32.totalorder 1, %s13
      %p179 = scmp.lt.s32.totalorder %s13, 3
      %p180 = pnand %p178, %p179
      %p181 = pneg %p180
      // Predicated region
      $region33: #{tpu_custom_call.1} parent=5 // pred_check
        _
      $region34: #{tpu_custom_call.1} parent=5 // pred_check_branch
        %183 = sbr.rel (%p180) target = $region36
      $region35: #{tpu_custom_call.1} parent=5 // pred_region
        %s184 = ssub.s32 %s13, 1
        %s185 = sand.u32 %s26, 1
        %s186 = scalar_lea.sflag [#allocation3], %s185
        %s187 = sand.u32 %s26, 1
        %s188 = smul.addr %s187, 16
        %s189 = scalar_lea.vmem [#allocation2], %s188
        // Predicated region
        $region37: #{tpu_custom_call.1} parent=35 // pred_check
          %p190 = pneg %p39
        $region38: #{tpu_custom_call.1} parent=35 // pred_check_branch
          %192 = sbr.rel (%p190) target = $region40
        $region39: #{tpu_custom_call.1} parent=35 // pred_region
          %194 = dma.done %s186, 256
        $region40: #{tpu_custom_call.1} parent=35 // pred_fallthru
          _
        %s195 = sand.u32 %s26, 1
        %s196 = scalar_lea.sflag [#allocation3], %s195
        %s197 = sand.u32 %s26, 1
        %s198 = smul.addr %s197, 16
        %s199 = scalar_lea.vmem [#allocation2], %s198
        %p200 = pneg %p39
        %p201 = pneg %p36
        %p202 = pneg %p60
        %p203 = pneg %p57
        %p204 = pneg %p81
        %p205 = pneg %p78
        %p206 = pneg %p102
        %p207 = pneg %p99
        %p208 = pneg %p128
        %p209 = pneg %p125
        %s210 = smul.u32 2, %s18
        %p211 = scmp.lt.s32.totalorder %s210, 3
        %s212 = scalar_select %p211, %s210, 3
        %s213 = smul.addr %s212, 8
        %s214 = scalar_lea.vmem %s4, %s213
        %s215 = smul.u32 2, %s18
        %s216 = smul.u32 2, %s18
        %p217 = scmp.lt.s32.totalorder %s216, 3
        %s218 = scalar_select %p217, %s216, 3
        %s219 = smul.addr %s218, 8
        %s220 = scalar_lea.vmem %s4, %s219
        %s221 = smul.u32 2, %s18
        %v223 = vld [vmem:[%s189] sm:$0xff]
        %v224 = vld [vmem:[%s189 + $0x8] sm:$0xff]
        %v225 = vpack.c.bf16 %v224, %v223
        %v226 = vld [vmem:[%s1] sm:$0xf]
        %v227 = vld [vmem:[%s1 + $0x4] sm:$0xf]
        %v228 = vld [vmem:[%s1 + $0x8] sm:$0xf]
        %v229 = vld [vmem:[%s1 + $0xc] sm:$0xf]
        %v230 = vld [vmem:[%s2] sm:$0x1]
        %v232 = vperm.slane %v230, 0
        %v238 = vunpack.c.l.b16 %v226
        %v239 = vunpack.c.l.b16 %v227
        %v240 = vunpack.c.l.b16 %v228
        %v241 = vunpack.c.l.b16 %v229
        %v242 = vpack.c.b16 %v239, %v238
        %v243 = vpack.c.b16 %v241, %v240
        %vm246 = vcmask 261120
        %v248 = vsel %vm246, %v225, 0
        %250 = vmatpush.bf16.msra.mxu0 0
        %251 = vmatpush.bf16.msra.mxu0 0
        %252 = vmatpush.bf16.msra.mxu0 0
        %253 = vmatpush.bf16.msra.mxu0 0
        %254 = vmatpush.bf16.msra.mxu0 0
        %255 = vmatpush.bf16.msra.mxu0 0
        %256 = vmatpush.bf16.msra.mxu0 %v243
        %257 = vmatpush.bf16.msra.mxu0 %v242
        %258 = vmatmul.bf16.gmra.mxu0 %v248
        %v259 = vpop.f32.mrf.mxu0
        %v260 = vadd.f32 %v232, %v259
        %v261 = vpop.f32.mrf.mxu0
        %v262 = vadd.f32 %v232, %v261
        %263 = vdwg.mxu0
        %v264 = vmax.f32 %v260, 0.0
        %v265 = vmax.f32 %v262, 0.0
        %v266 = vpack.c.bf16 %v265, %v264
        %v267 = vld [vmem:[%s3] sm:$0xf]
        %v268 = vld [vmem:[%s3 + $0x4] sm:$0xf]
        %v269 = vld [vmem:[%s3 + $0x8] sm:$0xf]
        %v270 = vld [vmem:[%s3 + $0xc] sm:$0xf]
        %v275 = vunpack.c.l.b16 %v267
        %v276 = vunpack.c.l.b16 %v268
        %v277 = vunpack.c.l.b16 %v269
        %v278 = vunpack.c.l.b16 %v270
        %v279 = vpack.c.b16 %v276, %v275
        %v280 = vpack.c.b16 %v278, %v277
        %v284 = vsel %vm246, %v266, 0
        %286 = vmatpush.bf16.msra.mxu0 0
        %287 = vmatpush.bf16.msra.mxu0 0
        %288 = vmatpush.bf16.msra.mxu0 0
        %289 = vmatpush.bf16.msra.mxu0 0
        %290 = vmatpush.bf16.msra.mxu0 0
        %291 = vmatpush.bf16.msra.mxu0 0
        %292 = vmatpush.bf16.msra.mxu0 %v280
        %293 = vmatpush.bf16.msra.mxu0 %v279
        %294 = vmatmul.bf16.gmra.mxu0 %v284
        %v295 = vpop.f32.mrf.mxu0
        %v296 = vadd.f32 0.0, %v295
        %v297 = vpop.f32.mrf.mxu0
        %v298 = vadd.f32 0.0, %v297
        %299 = vdwg.mxu0
        %v300 = vxor.u32 %v296, 2147483648
        %v301 = vxor.u32 %v298, 2147483648
        %v302 = vmul.f32 %v300, 1.442695
        %v303 = vpow.pop %v302
        %v304 = vmul.f32 %v301, 1.442695
        %v305 = vpow.pop %v304
        %v306 = vadd.f32 %v303, 1.0
        %v307 = vadd.f32 %v305, 1.0
        %v308 = vrcp.pop %v306
        %v309 = vmul.f32 %v306, %v308
        %v310 = vsub.f32 1.0, %v309
        %v311 = vmul.f32 %v308, %v310
        %v312 = vadd.f32 %v308, %v311
        %vm313 = vweird.f32 %v306
        %vm314 = vweird.f32 %v308
        %vm315 = vmor %vm313, %vm314
        %v316 = vsel %vm315, %v308, %v312
        %v317 = vand.u32 2147483647, %v306
        %vm318 = vcmp.eq.f32.partialorder %v317, 8.507059e+37
        %v319 = vand.u32 %v306, 2147483648
        %v320 = vor.u32 1.1754944e-38, %v319
        %v321 = vsel %vm318, %v320, %v316
        %v322 = vmul.f32 1.0, %v321
        %v323 = vrcp.pop %v307
        %v324 = vmul.f32 %v307, %v323
        %v325 = vsub.f32 1.0, %v324
        %v326 = vmul.f32 %v323, %v325
        %v327 = vadd.f32 %v323, %v326
        %vm328 = vweird.f32 %v307
        %vm329 = vweird.f32 %v323
        %vm330 = vmor %vm328, %vm329
        %v331 = vsel %vm330, %v323, %v327
        %v332 = vand.u32 2147483647, %v307
        %vm333 = vcmp.eq.f32.partialorder %v332, 8.507059e+37
        %v334 = vand.u32 %v307, 2147483648
        %v335 = vor.u32 1.1754944e-38, %v334
        %v336 = vsel %vm333, %v335, %v331
        %v337 = vmul.f32 1.0, %v336
        %vm338 = vcmask 130048
        %339 = vst.msk [vmem:[%s220] sm:$0xff] %vm338, %v322
        %340 = vst.msk [vmem:[%s220 + $0x8] sm:$0xff] %vm338, %v337
        %s341 = smul.u32 2, %s18
        %p342 = scmp.lt.s32.totalorder %s341, 3
        %s343 = scalar_select %p342, %s341, 3
        %s344 = smul.addr %s343, 8
        %s345 = scalar_lea.vmem %s4, %s344
        // Predicated region
        $region41: #{tpu_custom_call.1} parent=35 // pred_check
          %p346 = pneg %p125
        $region42: #{tpu_custom_call.1} parent=35 // pred_check_branch
          %348 = sbr.rel (%p346) target = $region44
        $region43: #{tpu_custom_call.1} parent=35 // pred_region
          %s349 = smul.u32 2, %s18
        $region44: #{tpu_custom_call.1} parent=35 // pred_fallthru
          _
      $region36: #{tpu_custom_call.1} parent=5 // pred_fallthru
        _
      %p350 = scmp.le.s32.totalorder 2, %s13
      // Predicated region
      $region45: #{tpu_custom_call.1} parent=5 // pred_check
        %p351 = pneg %p350
      $region46: #{tpu_custom_call.1} parent=5 // pred_check_branch
        %353 = sbr.rel (%p351) target = $region48
      $region47: #{tpu_custom_call.1} parent=5 // pred_region
        %s354 = ssub.s32 %s13, 2
        // Predicated region
        $region49: #{tpu_custom_call.1} parent=47 // pred_check
          %p355 = pneg %p131
        $region50: #{tpu_custom_call.1} parent=47 // pred_check_branch
          %357 = sbr.rel (%p355) target = $region52
        $region51: #{tpu_custom_call.1} parent=47 // pred_region
          %s358 = smul.u32 2, %s19
          %p359 = scmp.lt.s32.totalorder %s358, 3
          %s360 = scalar_select %p359, %s358, 3
          %s361 = smul.addr %s360, 8
          %s362 = scalar_lea.vmem %s4, %s361
        $region52: #{tpu_custom_call.1} parent=47 // pred_fallthru
          _
      $region48: #{tpu_custom_call.1} parent=5 // pred_fallthru
        _
    $region6: #{tpu_custom_call.1} parent=1 // loop_footer
      %s17 = sadd.s32 1, %s13
    $region7: #{tpu_custom_call.1} parent=1 // loop_footer_branch
      %12 = sbr.rel target = $region3
    $region8: #{tpu_custom_call.1} parent=1 // loop_exit
      _
    %363 = vsyncpa [#allocation3], 1
    %s364 = scalar_lea.sflag [#allocation3], 1
    %365 = vsyncpa %s364, 1

</llo_original>
